<compile_context>
chip_gen: v5e
topology: v5e:2x2
jax: 0.10.0
libtpu: 0.0.40
codegen_flags: <defaults>
</compile_context>

<pallas_src>
import numpy as np
import jax
import jax.numpy as jnp
from jax.experimental import pallas as pl
from jax.experimental.pallas import tpu as pltpu


# ----------------------------------------------------------------------------
# Gaussian kernel construction (mirrors SSIMLoss._create_gaussian_kernel).
# ----------------------------------------------------------------------------
def _gaussian_taps_1d(kernel_size: int, sigma: float):
    start = (1 - kernel_size) / 2.0
    end = (1 + kernel_size) / 2.0
    k1d = np.arange(start, end, step=1.0, dtype=np.float32)
    k1d = np.exp(-np.power(k1d / sigma, 2) / 2.0).astype(np.float32)
    k1d = k1d / k1d.sum()
    return [float(t) for t in k1d]


def _gaussian_kernel_2d(kernel_size: int, sigma: float) -> np.ndarray:
    k1d = np.asarray(_gaussian_taps_1d(kernel_size, sigma), dtype=np.float32)
    return np.outer(k1d, k1d).astype(np.float32)


def _band_matrix(n: int, taps) -> np.ndarray:
    """(n, n) banded-Toeplitz matrix encoding a 1-D 'same' conv w/ zero pad.

    out[i] = sum_r m[i, r] * in[r]  ==  sum_d taps[d] * in_zero_padded[i + d].
    The Gaussian taps are symmetric, so m is symmetric (m == m.T).
    """
    K = len(taps)
    pad = K // 2
    m = np.zeros((n, n), dtype=np.float32)
    for i in range(n):
        lo, hi = max(0, i - pad), min(n, i + pad + 1)
        for r in range(lo, hi):
            m[i, r] = taps[r - i + pad]
    return m


# ----------------------------------------------------------------------------
# Block-size selection (per-generation VMEM, cores).
# ----------------------------------------------------------------------------
def _round_up(n: int, m: int) -> int:
    return ((n + m - 1) // m) * m


def _tpu_vmem_bytes_and_cores():
    """Best-effort query of per-core VMEM capacity and TensorCores per chip."""
    vmem = 64 * 1024 * 1024          # conservative default (v7x-sized VMEM)
    cores = 1
    try:
        info = pltpu.get_tpu_info()
        vmem = int(getattr(info, "vmem_capacity_bytes", vmem)) or vmem
        cores = int(getattr(info, "num_cores",
                            getattr(info, "core_count", cores))) or cores
    except Exception:
        pass
    return vmem, cores


def _choose_planes_per_block(NC: int, H8: int, W: int,
                             vmem_budget_bytes: int, num_cores: int,
                             max_block_rows: int = 256) -> int:
    """Planes per grid step.

    max_block_rows bounds the block-diagonal vertical band matrix: its VMEM
    footprint and the wasted MXU flops both grow with (B*H8)^2, while per-step
    pipeline overhead (~0.35us) shrinks with B, so ~256 rows is a balance point.
    """
    Wl = _round_up(W, 128)           # physical lane padding of (rows, W) bufs
    W8 = _round_up(W, 8)

    def step_bytes(b):
        bh = b * H8
        bhl = _round_up(bh, 128)
        # 4 I/O arrays double-buffered (8x) + ~14 live (rows, W) temporaries in
        # the kernel + band matrices (double-buffered + one live copy).
        return 4 * (22 * bh * Wl + 3 * bh * bhl + 3 * W8 * Wl)

    b = max(1, min(NC, max(1, max_block_rows // H8)))
    if num_cores > 1 and NC >= num_cores:
        b = min(b, -(-NC // num_cores))   # keep grid >= #cores (v7x megacore)
    while b > 1 and step_bytes(b) > vmem_budget_bytes:
        b -= 1
    g = -(-NC // b)                       # re-balance: minimize padded planes
    b = -(-NC // g)
    return max(1, b)


# ----------------------------------------------------------------------------
# Kernel.
# ----------------------------------------------------------------------------
def _make_ssim_kernel():
    c1 = 0.01 ** 2
    c2 = 0.03 ** 2

    def ssim_kernel(x_ref, y_ref, bh_ref, bvd_ref, l_ref, cs_ref):
        # x_ref / y_ref: (B*H8, W) -- B planes of H8 rows each, folded.
        x = x_ref[...]
        y = y_ref[...]
        bh = bh_ref[...]       # (W, W)   horizontal blur (right-multiply)
        bvd = bvd_ref[...]     # (BH, BH) block-diag vertical blur (left-mult)

        def blur(p):
            # Zero-padded separable Gaussian blur, entirely on the MXU.
            t = jnp.dot(p, bh, preferred_element_type=jnp.float32)
            return jnp.dot(bvd, t, preferred_element_type=jnp.float32)

        ux = blur(x)
        uy = blur(y)
        # Write l_map as soon as possible to shrink the live value set.
        l_ref[...] = (2.0 * ux * uy + c1) * pl.reciprocal(
            ux * ux + uy * uy + c1, approx=False)

        uxx = blur(x * x)
        uyy = blur(y * y)
        uxy = blur(x * y)

        vx = uxx - ux * ux
        vy = uyy - uy * uy
        vxy = uxy - ux * uy
        cs_ref[...] = (2.0 * vxy + c2) * pl.reciprocal(vx + vy + c2,
                                                       approx=False)

    return ssim_kernel


# ----------------------------------------------------------------------------
# Wrapper.
# ----------------------------------------------------------------------------
def ssim_loss(x: jax.Array, y: jax.Array, kernel_size: int = 11,
              sigma: float = 1.5):
    """Returns (l_map, cs_map), each (N, C, H, W), matching SSIMLoss.forward."""
    assert x.shape == y.shape and x.ndim == 4
    N, C, H, W = x.shape
    NC = N * C
    taps = _gaussian_taps_1d(kernel_size, sigma)

    # Sublane-align the plane height with zero rows.  Exact: the extra rows are
    # zero, and zero-padded conv treats everything past row H-1 as zero anyway;
    # the extra output rows are sliced off below.
    H8 = _round_up(H, 8)

    x32 = x.astype(jnp.float32).reshape(NC, H, W)
    y32 = y.astype(jnp.float32).reshape(NC, H, W)
    if H8 != H:
        rp = ((0, 0), (0, H8 - H), (0, 0))
        x32 = jnp.pad(x32, rp)
        y32 = jnp.pad(y32, rp)

    vmem_bytes, num_cores = _tpu_vmem_bytes_and_cores()
    vmem_budget = int(vmem_bytes * 0.55)          # honest chooser budget
    vmem_limit = int(vmem_bytes * 0.75)           # raised scoped-VMEM limit

    B = _choose_planes_per_block(NC, H8, W, vmem_budget, num_cores)
    G = -(-NC // B)
    NCp = G * B
    if NCp != NC:
        # Pad with zero planes so B divides the plane count (zero planes give
        # l = cs = 1, finite, and are sliced off below).
        pp = ((0, NCp - NC), (0, 0), (0, 0))
        x32 = jnp.pad(x32, pp)
        y32 = jnp.pad(y32, pp)

    BH = B * H8
    x2 = x32.reshape(NCp * H8, W)
    y2 = y32.reshape(NCp * H8, W)

    bh_mat = jnp.asarray(_band_matrix(W, taps))                       # (W, W)
    bv_plane = _band_matrix(H8, taps)                                 # (H8, H8)
    bvd_mat = jnp.asarray(np.kron(np.eye(B, dtype=np.float32), bv_plane))

    io_spec = pl.BlockSpec((BH, W), lambda i: (i, 0))
    bh_spec = pl.BlockSpec((W, W), lambda i: (0, 0))       # VMEM-resident
    bvd_spec = pl.BlockSpec((BH, BH), lambda i: (0, 0))    # VMEM-resident

    l2, cs2 = pl.pallas_call(
        _make_ssim_kernel(),
        out_shape=(jax.ShapeDtypeStruct((NCp * H8, W), jnp.float32),
                   jax.ShapeDtypeStruct((NCp * H8, W), jnp.float32)),
        grid=(G,),
        in_specs=[io_spec, io_spec, bh_spec, bvd_spec],
        out_specs=(io_spec, io_spec),
        compiler_params=pltpu.CompilerParams(
            dimension_semantics=("parallel",),
            vmem_limit_bytes=vmem_limit),
    )(x2, y2, bh_mat, bvd_mat)

    l_map = l2.reshape(NCp, H8, W)[:NC, :H, :].reshape(N, C, H, W)
    cs_map = cs2.reshape(NCp, H8, W)[:NC, :H, :].reshape(N, C, H, W)
    return l_map, cs_map


# ----------------------------------------------------------------------------
# Pure-JAX reference (lax depthwise conv) for a correctness check.
# ----------------------------------------------------------------------------
def _reference_ssim(x, y, kernel_size=11, sigma=1.5):
    N, C, H, W = x.shape
    pad = kernel_size // 2
    k2d = jnp.asarray(_gaussian_kernel_2d(kernel_size, sigma))
    w = jnp.broadcast_to(k2d, (C, 1, kernel_size, kernel_size))  # OIHW depthwise

    def conv(z):
        return jax.lax.conv_general_dilated(
            z, w, window_strides=(1, 1), padding=[(pad, pad), (pad, pad)],
            dimension_numbers=("NCHW", "OIHW", "NCHW"), feature_group_count=C,
            precision=jax.lax.Precision.HIGHEST)

    ux, uy = conv(x), conv(y)
    uxx, uyy, uxy = conv(x * x), conv(y * y), conv(x * y)
    vx, vy, vxy = uxx - ux * ux, uyy - uy * uy, uxy - ux * uy
    c1, c2 = 0.01 ** 2, 0.03 ** 2
    cs_map = (2 * vxy + c2) / (vx + vy + c2)
    l_map = (2 * ux * uy + c1) / (ux ** 2 + uy ** 2 + c1)
    return l_map, cs_map


if __name__ == "__main__":
    key = jax.random.PRNGKey(0)
    kx, ky = jax.random.split(key)
    # groups=3 in the PyTorch module => 3 channels.
    x = jax.random.uniform(kx, (2, 3, 16, 16), dtype=jnp.float32)
    y = jax.random.uniform(ky, (2, 3, 16, 16), dtype=jnp.float32)

    l_map, cs_map = ssim_loss(x, y)
    jax.block_until_ready((l_map, cs_map))

    l_ref, cs_ref = _reference_ssim(x, y)
    np.testing.assert_allclose(np.asarray(l_map), np.asarray(l_ref),
                               rtol=1e-4, atol=1e-5)
    np.testing.assert_allclose(np.asarray(cs_map), np.asarray(cs_ref),
                               rtol=1e-4, atol=1e-5)

    print("KERNEL_OK")
</pallas_src>

<mosaic_0001>
module attributes {stable_mosaic.version = 11 : i64} {
  func.func @ssim_kernel(%arg0: i32, %arg1: memref<96x16xf32, #tpu.memory_space<vmem>>, %arg2: memref<96x16xf32, #tpu.memory_space<vmem>>, %arg3: memref<16x16xf32, #tpu.memory_space<vmem>>, %arg4: memref<96x96xf32, #tpu.memory_space<vmem>>, %arg5: memref<96x16xf32, #tpu.memory_space<vmem>>, %arg6: memref<96x16xf32, #tpu.memory_space<vmem>>) attributes {dimension_semantics = [#tpu.dimension_semantics<parallel>], iteration_bounds = array<i64: 1>, scalar_prefetch = 0 : i64, scratch_operands = 0 : i64, tpu.core_type = #tpu.core_type<tc>, window_params = [{transform_indices = @transform_0, window_bounds = array<i64: 96, 16>}, {transform_indices = @transform_1, window_bounds = array<i64: 96, 16>}, {pipeline_mode = #tpu.pipeline_mode<synchronous>, transform_indices = @transform_2, window_bounds = array<i64: 16, 16>}, {pipeline_mode = #tpu.pipeline_mode<synchronous>, transform_indices = @transform_3, window_bounds = array<i64: 96, 96>}, {transform_indices = @transform_4, window_bounds = array<i64: 96, 16>}, {transform_indices = @transform_5, window_bounds = array<i64: 96, 16>}]} {
    %c0 = arith.constant 0 : index
    %c0_0 = arith.constant 0 : index
    %0 = vector.load %arg1[%c0, %c0_0] : memref<96x16xf32, #tpu.memory_space<vmem>>, vector<96x16xf32>
    %c0_1 = arith.constant 0 : index
    %c0_2 = arith.constant 0 : index
    %1 = vector.load %arg2[%c0_1, %c0_2] : memref<96x16xf32, #tpu.memory_space<vmem>>, vector<96x16xf32>
    %c0_3 = arith.constant 0 : index
    %c0_4 = arith.constant 0 : index
    %2 = vector.load %arg3[%c0_3, %c0_4] : memref<16x16xf32, #tpu.memory_space<vmem>>, vector<16x16xf32>
    %c0_5 = arith.constant 0 : index
    %c0_6 = arith.constant 0 : index
    %3 = vector.load %arg4[%c0_5, %c0_6] : memref<96x96xf32, #tpu.memory_space<vmem>>, vector<96x96xf32>
    %cst = arith.constant dense<0.000000e+00> : vector<96x16xf32>
    %4 = tpu.matmul %0, %2, %cst {dimension_numbers = #tpu.dot_dimension_numbers<[1], [0], [0], [1], [0, 0, 1, 1], [], []>} : vector<96x16xf32>, vector<16x16xf32>, vector<96x16xf32> -> vector<96x16xf32>
    %cst_7 = arith.constant dense<0.000000e+00> : vector<96x16xf32>
    %5 = tpu.matmul %3, %4, %cst_7 {dimension_numbers = #tpu.dot_dimension_numbers<[1], [0], [0], [1], [0, 0, 1, 1], [], []>} : vector<96x96xf32>, vector<96x16xf32>, vector<96x16xf32> -> vector<96x16xf32>
    %cst_8 = arith.constant dense<0.000000e+00> : vector<96x16xf32>
    %6 = tpu.matmul %1, %2, %cst_8 {dimension_numbers = #tpu.dot_dimension_numbers<[1], [0], [0], [1], [0, 0, 1, 1], [], []>} : vector<96x16xf32>, vector<16x16xf32>, vector<96x16xf32> -> vector<96x16xf32>
    %cst_9 = arith.constant dense<0.000000e+00> : vector<96x16xf32>
    %7 = tpu.matmul %3, %6, %cst_9 {dimension_numbers = #tpu.dot_dimension_numbers<[1], [0], [0], [1], [0, 0, 1, 1], [], []>} : vector<96x96xf32>, vector<96x16xf32>, vector<96x16xf32> -> vector<96x16xf32>
    %cst_10 = arith.constant 2.000000e+00 : f32
    %8 = vector.broadcast %cst_10 : f32 to vector<96x16xf32>
    %9 = arith.mulf %8, %5 : vector<96x16xf32>
    %10 = arith.mulf %9, %7 : vector<96x16xf32>
    %cst_11 = arith.constant 9.99999974E-5 : f32
    %11 = vector.broadcast %cst_11 : f32 to vector<96x16xf32>
    %12 = arith.addf %10, %11 : vector<96x16xf32>
    %13 = arith.mulf %5, %5 : vector<96x16xf32>
    %14 = arith.mulf %7, %7 : vector<96x16xf32>
    %15 = arith.addf %13, %14 : vector<96x16xf32>
    %cst_12 = arith.constant 9.99999974E-5 : f32
    %16 = vector.broadcast %cst_12 : f32 to vector<96x16xf32>
    %17 = arith.addf %15, %16 : vector<96x16xf32>
    %18 = tpu.reciprocal %17 : vector<96x16xf32> -> vector<96x16xf32>
    %19 = arith.mulf %12, %18 : vector<96x16xf32>
    %c0_13 = arith.constant 0 : index
    %c0_14 = arith.constant 0 : index
    %20 = vector.load %arg5[%c0_13, %c0_14] : memref<96x16xf32, #tpu.memory_space<vmem>>, vector<96x16xf32>
    tpu.vector_store %arg5[%c0_13, %c0_14], %19 {strides = array<i32>} : memref<96x16xf32, #tpu.memory_space<vmem>>, vector<96x16xf32>,
    %21 = arith.mulf %0, %0 : vector<96x16xf32>
    %cst_15 = arith.constant dense<0.000000e+00> : vector<96x16xf32>
    %22 = tpu.matmul %21, %2, %cst_15 {dimension_numbers = #tpu.dot_dimension_numbers<[1], [0], [0], [1], [0, 0, 1, 1], [], []>} : vector<96x16xf32>, vector<16x16xf32>, vector<96x16xf32> -> vector<96x16xf32>
    %cst_16 = arith.constant dense<0.000000e+00> : vector<96x16xf32>
    %23 = tpu.matmul %3, %22, %cst_16 {dimension_numbers = #tpu.dot_dimension_numbers<[1], [0], [0], [1], [0, 0, 1, 1], [], []>} : vector<96x96xf32>, vector<96x16xf32>, vector<96x16xf32> -> vector<96x16xf32>
    %24 = arith.mulf %1, %1 : vector<96x16xf32>
    %cst_17 = arith.constant dense<0.000000e+00> : vector<96x16xf32>
    %25 = tpu.matmul %24, %2, %cst_17 {dimension_numbers = #tpu.dot_dimension_numbers<[1], [0], [0], [1], [0, 0, 1, 1], [], []>} : vector<96x16xf32>, vector<16x16xf32>, vector<96x16xf32> -> vector<96x16xf32>
    %cst_18 = arith.constant dense<0.000000e+00> : vector<96x16xf32>
    %26 = tpu.matmul %3, %25, %cst_18 {dimension_numbers = #tpu.dot_dimension_numbers<[1], [0], [0], [1], [0, 0, 1, 1], [], []>} : vector<96x96xf32>, vector<96x16xf32>, vector<96x16xf32> -> vector<96x16xf32>
    %27 = arith.mulf %0, %1 : vector<96x16xf32>
    %cst_19 = arith.constant dense<0.000000e+00> : vector<96x16xf32>
    %28 = tpu.matmul %27, %2, %cst_19 {dimension_numbers = #tpu.dot_dimension_numbers<[1], [0], [0], [1], [0, 0, 1, 1], [], []>} : vector<96x16xf32>, vector<16x16xf32>, vector<96x16xf32> -> vector<96x16xf32>
    %cst_20 = arith.constant dense<0.000000e+00> : vector<96x16xf32>
    %29 = tpu.matmul %3, %28, %cst_20 {dimension_numbers = #tpu.dot_dimension_numbers<[1], [0], [0], [1], [0, 0, 1, 1], [], []>} : vector<96x96xf32>, vector<96x16xf32>, vector<96x16xf32> -> vector<96x16xf32>
    %30 = arith.mulf %5, %5 : vector<96x16xf32>
    %31 = arith.subf %23, %30 : vector<96x16xf32>
    %32 = arith.mulf %7, %7 : vector<96x16xf32>
    %33 = arith.subf %26, %32 : vector<96x16xf32>
    %34 = arith.mulf %5, %7 : vector<96x16xf32>
    %35 = arith.subf %29, %34 : vector<96x16xf32>
    %cst_21 = arith.constant 2.000000e+00 : f32
    %36 = vector.broadcast %cst_21 : f32 to vector<96x16xf32>
    %37 = arith.mulf %36, %35 : vector<96x16xf32>
    %cst_22 = arith.constant 8.99999984E-4 : f32
    %38 = vector.broadcast %cst_22 : f32 to vector<96x16xf32>
    %39 = arith.addf %37, %38 : vector<96x16xf32>
    %40 = arith.addf %31, %33 : vector<96x16xf32>
    %cst_23 = arith.constant 8.99999984E-4 : f32
    %41 = vector.broadcast %cst_23 : f32 to vector<96x16xf32>
    %42 = arith.addf %40, %41 : vector<96x16xf32>
    %43 = tpu.reciprocal %42 : vector<96x16xf32> -> vector<96x16xf32>
    %44 = arith.mulf %39, %43 : vector<96x16xf32>
    %c0_24 = arith.constant 0 : index
    %c0_25 = arith.constant 0 : index
    %45 = vector.load %arg6[%c0_24, %c0_25] : memref<96x16xf32, #tpu.memory_space<vmem>>, vector<96x16xf32>
    tpu.vector_store %arg6[%c0_24, %c0_25], %44 {strides = array<i32>} : memref<96x16xf32, #tpu.memory_space<vmem>>, vector<96x16xf32>,
    return
  }
  func.func @transform_0(%arg0: i32) -> (i32, i32) {
    %c0_i32 = arith.constant 0 : i32
    %c0_i32_0 = arith.constant 0 : i32
    return %arg0, %c0_i32 : i32, i32
  }
  func.func @transform_1(%arg0: i32) -> (i32, i32) {
    %c0_i32 = arith.constant 0 : i32
    %c0_i32_0 = arith.constant 0 : i32
    return %arg0, %c0_i32 : i32, i32
  }
  func.func @transform_2(%arg0: i32) -> (i32, i32) {
    %c0_i32 = arith.constant 0 : i32
    %c0_i32_0 = arith.constant 0 : i32
    %c0_i32_1 = arith.constant 0 : i32
    return %c0_i32, %c0_i32_0 : i32, i32
  }
  func.func @transform_3(%arg0: i32) -> (i32, i32) {
    %c0_i32 = arith.constant 0 : i32
    %c0_i32_0 = arith.constant 0 : i32
    %c0_i32_1 = arith.constant 0 : i32
    return %c0_i32, %c0_i32_0 : i32, i32
  }
  func.func @transform_4(%arg0: i32) -> (i32, i32) {
    %c0_i32 = arith.constant 0 : i32
    %c0_i32_0 = arith.constant 0 : i32
    return %arg0, %c0_i32 : i32, i32
  }
  func.func @transform_5(%arg0: i32) -> (i32, i32) {
    %c0_i32 = arith.constant 0 : i32
    %c0_i32_0 = arith.constant 0 : i32
    return %arg0, %c0_i32 : i32, i32
  }
}

</mosaic_0001>

<llo_original>
// kernel: tpu_custom_call.1
$region0: #{tpu_custom_call.1}
  #allocation0 [shape = 'u32[]', space=smem, size = 0x4, offset = 0x4, fixed_abs, tag = 'smem constant byte address 0x4 - core index']
  #allocation1 [shape = 'u32[72,128]{1,0:T(1,128)}', space=vmem, size = 0x9000, scoped, tag = 'internal scratch']
  %s0 = inlined_call_operand.vmem [shape: f32[96,16], index: 0, kind: input, shape index: {}]
  %s1 = inlined_call_operand.vmem [shape: f32[96,16], index: 1, kind: input, shape index: {}]
  %s2 = inlined_call_operand.vmem [shape: f32[16,16], index: 2, kind: input, shape index: {}]
  %s3 = inlined_call_operand.vmem [shape: f32[96,96], index: 3, kind: input, shape index: {}]
  %s4 = inlined_call_operand.vmem [shape: f32[96,16], index: 4, kind: output, shape index: {0}]
  %s5 = inlined_call_operand.vmem [shape: f32[96,16], index: 5, kind: output, shape index: {1}]
  %6 = xla_tuple %s4, %s5
  %s7 = sld [smem:[#allocation0]]
  $region34: #{tpu_custom_call.1} parent=0
    _
  %s9 = ssub.s32 1, %s7
  %s10 = scalar_select 0, %s9, %s7
  // Predicated region
  $region2: #{tpu_custom_call.1} parent=0 // pred_check
    _
  $region3: #{tpu_custom_call.1} parent=0 // pred_check_branch
    %12 = sbr.rel (0) target = $region5
  $region4: #{tpu_custom_call.1} parent=0 // pred_region
    _
  $region5: #{tpu_custom_call.1} parent=0 // pred_fallthru
    _
  // Predicated region
  $region6: #{tpu_custom_call.1} parent=0 // pred_check
    _
  $region7: #{tpu_custom_call.1} parent=0 // pred_check_branch
    %14 = sbr.rel (0) target = $region9
  $region8: #{tpu_custom_call.1} parent=0 // pred_region
    _
  $region9: #{tpu_custom_call.1} parent=0 // pred_fallthru
    _
  // Predicated region
  $region10: #{tpu_custom_call.1} parent=0 // pred_check
    _
  $region11: #{tpu_custom_call.1} parent=0 // pred_check_branch
    %16 = sbr.rel (0) target = $region13
  $region12: #{tpu_custom_call.1} parent=0 // pred_region
    _
  $region13: #{tpu_custom_call.1} parent=0 // pred_fallthru
    _
  // Predicated region
  $region14: #{tpu_custom_call.1} parent=0 // pred_check
    _
  $region15: #{tpu_custom_call.1} parent=0 // pred_check_branch
    %18 = sbr.rel (0) target = $region17
  $region16: #{tpu_custom_call.1} parent=0 // pred_region
    _
  $region17: #{tpu_custom_call.1} parent=0 // pred_fallthru
    _
  %v19 = vld [vmem:[%s0] sm:$0xff]
  %v20 = vld [vmem:[%s0 + $0x8] sm:$0xff]
  %v21 = vld [vmem:[%s0 + $0x10] sm:$0xff]
  %v22 = vld [vmem:[%s0 + $0x18] sm:$0xff]
  %v23 = vld [vmem:[%s0 + $0x20] sm:$0xff]
  %v24 = vld [vmem:[%s0 + $0x28] sm:$0xff]
  %v25 = vld [vmem:[%s0 + $0x30] sm:$0xff]
  %v26 = vld [vmem:[%s0 + $0x38] sm:$0xff]
  %v27 = vld [vmem:[%s0 + $0x40] sm:$0xff]
  %v28 = vld [vmem:[%s0 + $0x48] sm:$0xff]
  %v29 = vld [vmem:[%s0 + $0x50] sm:$0xff]
  %v30 = vld [vmem:[%s0 + $0x58] sm:$0xff]
  %v31 = vld [vmem:[%s1] sm:$0xff]
  %v32 = vld [vmem:[%s1 + $0x8] sm:$0xff]
  %v33 = vld [vmem:[%s1 + $0x10] sm:$0xff]
  %v34 = vld [vmem:[%s1 + $0x18] sm:$0xff]
  %v35 = vld [vmem:[%s1 + $0x20] sm:$0xff]
  %v36 = vld [vmem:[%s1 + $0x28] sm:$0xff]
  %v37 = vld [vmem:[%s1 + $0x30] sm:$0xff]
  %v38 = vld [vmem:[%s1 + $0x38] sm:$0xff]
  %v39 = vld [vmem:[%s1 + $0x40] sm:$0xff]
  %v40 = vld [vmem:[%s1 + $0x48] sm:$0xff]
  %v41 = vld [vmem:[%s1 + $0x50] sm:$0xff]
  %v42 = vld [vmem:[%s1 + $0x58] sm:$0xff]
  %v43 = vld [vmem:[%s2] sm:$0xff]
  %v44 = vld [vmem:[%s2 + $0x8] sm:$0xff]
  %v45 = vld [vmem:[%s3] sm:$0xff]
  %v46 = vld [vmem:[%s3 + $0x8] sm:$0xff]
  %v47 = vld [vmem:[%s3 + $0x10] sm:$0xff]
  %v48 = vld [vmem:[%s3 + $0x18] sm:$0xff]
  %v49 = vld [vmem:[%s3 + $0x20] sm:$0xff]
  %v50 = vld [vmem:[%s3 + $0x28] sm:$0xff]
  %v51 = vld [vmem:[%s3 + $0x30] sm:$0xff]
  %v52 = vld [vmem:[%s3 + $0x38] sm:$0xff]
  %v53 = vld [vmem:[%s3 + $0x40] sm:$0xff]
  %v54 = vld [vmem:[%s3 + $0x48] sm:$0xff]
  %v55 = vld [vmem:[%s3 + $0x50] sm:$0xff]
  %v56 = vld [vmem:[%s3 + $0x58] sm:$0xff]
  %vm57 = vcmask 130048
  %v59 = vsel %vm57, %v19, 0
  %v62 = vsel %vm57, %v20, 0
  %v65 = vsel %vm57, %v21, 0
  %v68 = vsel %vm57, %v22, 0
  %v71 = vsel %vm57, %v23, 0
  %v74 = vsel %vm57, %v24, 0
  %v77 = vsel %vm57, %v25, 0
  %v80 = vsel %vm57, %v26, 0
  %v83 = vsel %vm57, %v27, 0
  %v86 = vsel %vm57, %v28, 0
  %v89 = vsel %vm57, %v29, 0
  %v92 = vsel %vm57, %v30, 0
  %94 = vmatpush.msra.mxu0 0.0
  %95 = vmatpush.msra.mxu0 0.0
  %96 = vmatpush.msra.mxu0 0.0
  %97 = vmatpush.msra.mxu0 0.0
  %98 = vmatpush.msra.mxu0 0.0
  %99 = vmatpush.msra.mxu0 0.0
  %100 = vmatpush.msra.mxu0 0.0
  %101 = vmatpush.msra.mxu0 0.0
  %102 = vmatpush.msra.mxu0 0.0
  %103 = vmatpush.msra.mxu0 0.0
  %104 = vmatpush.msra.mxu0 0.0
  %105 = vmatpush.msra.mxu0 0.0
  %106 = vmatpush.msra.mxu0 0.0
  %107 = vmatpush.msra.mxu0 0.0
  %108 = vmatpush.msra.mxu0 %v44
  %109 = vmatpush.msra.mxu0 %v43
  %110 = vmatmul.f32.gmra.mxu0 %v59
  %v111 = vpop.f32.mrf.mxu0
  %v112 = vadd.f32 0.0, %v111
  %113 = vmatmul.f32.gmra.mxu0 %v62
  %v114 = vpop.f32.mrf.mxu0
  %v115 = vadd.f32 0.0, %v114
  %116 = vmatmul.f32.gmra.mxu0 %v65
  %v117 = vpop.f32.mrf.mxu0
  %v118 = vadd.f32 0.0, %v117
  %119 = vmatmul.f32.gmra.mxu0 %v68
  %v120 = vpop.f32.mrf.mxu0
  %v121 = vadd.f32 0.0, %v120
  %122 = vmatmul.f32.gmra.mxu0 %v71
  %v123 = vpop.f32.mrf.mxu0
  %v124 = vadd.f32 0.0, %v123
  %125 = vmatmul.f32.gmra.mxu0 %v74
  %v126 = vpop.f32.mrf.mxu0
  %v127 = vadd.f32 0.0, %v126
  %128 = vmatmul.f32.gmra.mxu0 %v77
  %v129 = vpop.f32.mrf.mxu0
  %v130 = vadd.f32 0.0, %v129
  %131 = vmatmul.f32.gmra.mxu0 %v80
  %v132 = vpop.f32.mrf.mxu0
  %v133 = vadd.f32 0.0, %v132
  %134 = vmatmul.f32.gmra.mxu0 %v83
  %v135 = vpop.f32.mrf.mxu0
  %v136 = vadd.f32 0.0, %v135
  %137 = vmatmul.f32.gmra.mxu0 %v86
  %v138 = vpop.f32.mrf.mxu0
  %v139 = vadd.f32 0.0, %v138
  %140 = vmatmul.f32.gmra.mxu0 %v89
  %v141 = vpop.f32.mrf.mxu0
  %v142 = vadd.f32 0.0, %v141
  %143 = vmatmul.f32.gmra.mxu0 %v92
  %v144 = vpop.f32.mrf.mxu0
  %v145 = vadd.f32 0.0, %v144
  %146 = vdwg.mxu0
  %vm147 = vcmask 785408
  %v149 = vsel %vm147, %v45, 0
  %v152 = vsel %vm147, %v46, 0
  %v155 = vsel %vm147, %v47, 0
  %v158 = vsel %vm147, %v48, 0
  %v161 = vsel %vm147, %v49, 0
  %v164 = vsel %vm147, %v50, 0
  %v167 = vsel %vm147, %v51, 0
  %v170 = vsel %vm147, %v52, 0
  %v173 = vsel %vm147, %v53, 0
  %v176 = vsel %vm147, %v54, 0
  %v179 = vsel %vm147, %v55, 0
  %v182 = vsel %vm147, %v56, 0
  %184 = vmatpush.msra.mxu0 0.0
  %185 = vmatpush.msra.mxu0 0.0
  %186 = vmatpush.msra.mxu0 0.0
  %187 = vmatpush.msra.mxu0 0.0
  %188 = vmatpush.msra.mxu0 %v145
  %189 = vmatpush.msra.mxu0 %v142
  %190 = vmatpush.msra.mxu0 %v139
  %191 = vmatpush.msra.mxu0 %v136
  %192 = vmatpush.msra.mxu0 %v133
  %193 = vmatpush.msra.mxu0 %v130
  %194 = vmatpush.msra.mxu0 %v127
  %195 = vmatpush.msra.mxu0 %v124
  %196 = vmatpush.msra.mxu0 %v121
  %197 = vmatpush.msra.mxu0 %v118
  %198 = vmatpush.msra.mxu0 %v115
  %199 = vmatpush.msra.mxu0 %v112
  %200 = vmatmul.f32.gmra.mxu0 %v149
  %v201 = vpop.f32.mrf.mxu0
  %v202 = vadd.f32 0.0, %v201
  %203 = vmatmul.f32.gmra.mxu0 %v152
  %v204 = vpop.f32.mrf.mxu0
  %v205 = vadd.f32 0.0, %v204
  %206 = vmatmul.f32.gmra.mxu0 %v155
  %v207 = vpop.f32.mrf.mxu0
  %v208 = vadd.f32 0.0, %v207
  %209 = vmatmul.f32.gmra.mxu0 %v158
  %v210 = vpop.f32.mrf.mxu0
  %v211 = vadd.f32 0.0, %v210
  %212 = vmatmul.f32.gmra.mxu0 %v161
  %v213 = vpop.f32.mrf.mxu0
  %v214 = vadd.f32 0.0, %v213
  %215 = vmatmul.f32.gmra.mxu0 %v164
  %v216 = vpop.f32.mrf.mxu0
  %v217 = vadd.f32 0.0, %v216
  %218 = vmatmul.f32.gmra.mxu0 %v167
  %v219 = vpop.f32.mrf.mxu0
  %v220 = vadd.f32 0.0, %v219
  %221 = vmatmul.f32.gmra.mxu0 %v170
  %v222 = vpop.f32.mrf.mxu0
  %v223 = vadd.f32 0.0, %v222
  %224 = vmatmul.f32.gmra.mxu0 %v173
  %v225 = vpop.f32.mrf.mxu0
  %v226 = vadd.f32 0.0, %v225
  %227 = vmatmul.f32.gmra.mxu0 %v176
  %v228 = vpop.f32.mrf.mxu0
  %v229 = vadd.f32 0.0, %v228
  %230 = vmatmul.f32.gmra.mxu0 %v179
  %v231 = vpop.f32.mrf.mxu0
  %v232 = vadd.f32 0.0, %v231
  %233 = vmatmul.f32.gmra.mxu0 %v182
  %v234 = vpop.f32.mrf.mxu0
  %v235 = vadd.f32 0.0, %v234
  %236 = vdwg.mxu0
  %v238 = vsel %vm57, %v31, 0
  %v241 = vsel %vm57, %v32, 0
  %v244 = vsel %vm57, %v33, 0
  %v247 = vsel %vm57, %v34, 0
  %v250 = vsel %vm57, %v35, 0
  %v253 = vsel %vm57, %v36, 0
  %v256 = vsel %vm57, %v37, 0
  %v259 = vsel %vm57, %v38, 0
  %v262 = vsel %vm57, %v39, 0
  %v265 = vsel %vm57, %v40, 0
  %v268 = vsel %vm57, %v41, 0
  %v271 = vsel %vm57, %v42, 0
  %273 = vmatpush.msra.mxu0 0.0
  %274 = vmatpush.msra.mxu0 0.0
  %275 = vmatpush.msra.mxu0 0.0
  %276 = vmatpush.msra.mxu0 0.0
  %277 = vmatpush.msra.mxu0 0.0
  %278 = vmatpush.msra.mxu0 0.0
  %279 = vmatpush.msra.mxu0 0.0
  %280 = vmatpush.msra.mxu0 0.0
  %281 = vmatpush.msra.mxu0 0.0
  %282 = vmatpush.msra.mxu0 0.0
  %283 = vmatpush.msra.mxu0 0.0
  %284 = vmatpush.msra.mxu0 0.0
  %285 = vmatpush.msra.mxu0 0.0
  %286 = vmatpush.msra.mxu0 0.0
  %287 = vmatpush.msra.mxu0 %v44
  %288 = vmatpush.msra.mxu0 %v43
  %289 = vmatmul.f32.gmra.mxu0 %v238
  %v290 = vpop.f32.mrf.mxu0
  %v291 = vadd.f32 0.0, %v290
  %292 = vmatmul.f32.gmra.mxu0 %v241
  %v293 = vpop.f32.mrf.mxu0
  %v294 = vadd.f32 0.0, %v293
  %295 = vmatmul.f32.gmra.mxu0 %v244
  %v296 = vpop.f32.mrf.mxu0
  %v297 = vadd.f32 0.0, %v296
  %298 = vmatmul.f32.gmra.mxu0 %v247
  %v299 = vpop.f32.mrf.mxu0
  %v300 = vadd.f32 0.0, %v299
  %301 = vmatmul.f32.gmra.mxu0 %v250
  %v302 = vpop.f32.mrf.mxu0
  %v303 = vadd.f32 0.0, %v302
  %304 = vmatmul.f32.gmra.mxu0 %v253
  %v305 = vpop.f32.mrf.mxu0
  %v306 = vadd.f32 0.0, %v305
  %307 = vmatmul.f32.gmra.mxu0 %v256
  %v308 = vpop.f32.mrf.mxu0
  %v309 = vadd.f32 0.0, %v308
  %310 = vmatmul.f32.gmra.mxu0 %v259
  %v311 = vpop.f32.mrf.mxu0
  %v312 = vadd.f32 0.0, %v311
  %313 = vmatmul.f32.gmra.mxu0 %v262
  %v314 = vpop.f32.mrf.mxu0
  %v315 = vadd.f32 0.0, %v314
  %316 = vmatmul.f32.gmra.mxu0 %v265
  %v317 = vpop.f32.mrf.mxu0
  %v318 = vadd.f32 0.0, %v317
  %319 = vmatmul.f32.gmra.mxu0 %v268
  %v320 = vpop.f32.mrf.mxu0
  %v321 = vadd.f32 0.0, %v320
  %322 = vmatmul.f32.gmra.mxu0 %v271
  %v323 = vpop.f32.mrf.mxu0
  %v324 = vadd.f32 0.0, %v323
  %325 = vdwg.mxu0
  %326 = vmatpush.msra.mxu0 0.0
  %327 = vmatpush.msra.mxu0 0.0
  %328 = vmatpush.msra.mxu0 0.0
  %329 = vmatpush.msra.mxu0 0.0
  %330 = vmatpush.msra.mxu0 %v324
  %331 = vmatpush.msra.mxu0 %v321
  %332 = vmatpush.msra.mxu0 %v318
  %333 = vmatpush.msra.mxu0 %v315
  %334 = vmatpush.msra.mxu0 %v312
  %335 = vmatpush.msra.mxu0 %v309
  %336 = vmatpush.msra.mxu0 %v306
  %337 = vmatpush.msra.mxu0 %v303
  %338 = vmatpush.msra.mxu0 %v300
  %339 = vmatpush.msra.mxu0 %v297
  %340 = vmatpush.msra.mxu0 %v294
  %341 = vmatpush.msra.mxu0 %v291
  %342 = vmatmul.f32.gmra.mxu0 %v149
  %v343 = vpop.f32.mrf.mxu0
  %v344 = vadd.f32 0.0, %v343
  %345 = vmatmul.f32.gmra.mxu0 %v152
  %v346 = vpop.f32.mrf.mxu0
  %v347 = vadd.f32 0.0, %v346
  %348 = vmatmul.f32.gmra.mxu0 %v155
  %v349 = vpop.f32.mrf.mxu0
  %v350 = vadd.f32 0.0, %v349
  %351 = vmatmul.f32.gmra.mxu0 %v158
  %v352 = vpop.f32.mrf.mxu0
  %v353 = vadd.f32 0.0, %v352
  %354 = vmatmul.f32.gmra.mxu0 %v161
  %v355 = vpop.f32.mrf.mxu0
  %v356 = vadd.f32 0.0, %v355
  %357 = vmatmul.f32.gmra.mxu0 %v164
  %v358 = vpop.f32.mrf.mxu0
  %v359 = vadd.f32 0.0, %v358
  %360 = vmatmul.f32.gmra.mxu0 %v167
  %v361 = vpop.f32.mrf.mxu0
  %v362 = vadd.f32 0.0, %v361
  %363 = vmatmul.f32.gmra.mxu0 %v170
  %v364 = vpop.f32.mrf.mxu0
  %v365 = vadd.f32 0.0, %v364
  %366 = vmatmul.f32.gmra.mxu0 %v173
  %v367 = vpop.f32.mrf.mxu0
  %v368 = vadd.f32 0.0, %v367
  %369 = vmatmul.f32.gmra.mxu0 %v176
  %v370 = vpop.f32.mrf.mxu0
  %v371 = vadd.f32 0.0, %v370
  %372 = vmatmul.f32.gmra.mxu0 %v179
  %v373 = vpop.f32.mrf.mxu0
  %v374 = vadd.f32 0.0, %v373
  %375 = vmatmul.f32.gmra.mxu0 %v182
  %v376 = vpop.f32.mrf.mxu0
  %v377 = vadd.f32 0.0, %v376
  %378 = vdwg.mxu0
  %v379 = vmul.f32 %v202, 2.0
  %v380 = vmul.f32 %v205, 2.0
  %v381 = vmul.f32 %v208, 2.0
  %v382 = vmul.f32 %v211, 2.0
  %v383 = vmul.f32 %v214, 2.0
  %v384 = vmul.f32 %v217, 2.0
  %v385 = vmul.f32 %v220, 2.0
  %v386 = vmul.f32 %v223, 2.0
  %v387 = vmul.f32 %v226, 2.0
  %v388 = vmul.f32 %v229, 2.0
  %v389 = vmul.f32 %v232, 2.0
  %v390 = vmul.f32 %v235, 2.0
  %v391 = vmul.f32 %v379, %v344
  %v392 = vmul.f32 %v380, %v347
  %v393 = vmul.f32 %v381, %v350
  %v394 = vmul.f32 %v382, %v353
  %v395 = vmul.f32 %v383, %v356
  %v396 = vmul.f32 %v384, %v359
  %v397 = vmul.f32 %v385, %v362
  %v398 = vmul.f32 %v386, %v365
  %v399 = vmul.f32 %v387, %v368
  %v400 = vmul.f32 %v388, %v371
  %v401 = vmul.f32 %v389, %v374
  %v402 = vmul.f32 %v390, %v377
  %v403 = vadd.f32 %v391, 0.0001
  %v404 = vadd.f32 %v392, 0.0001
  %v405 = vadd.f32 %v393, 0.0001
  %v406 = vadd.f32 %v394, 0.0001
  %v407 = vadd.f32 %v395, 0.0001
  %v408 = vadd.f32 %v396, 0.0001
  %v409 = vadd.f32 %v397, 0.0001
  %v410 = vadd.f32 %v398, 0.0001
  %v411 = vadd.f32 %v399, 0.0001
  %v412 = vadd.f32 %v400, 0.0001
  %v413 = vadd.f32 %v401, 0.0001
  %v414 = vadd.f32 %v402, 0.0001
  %v415 = vmul.f32 %v202, %v202
  %v416 = vmul.f32 %v205, %v205
  %v417 = vmul.f32 %v208, %v208
  %v418 = vmul.f32 %v211, %v211
  %v419 = vmul.f32 %v214, %v214
  %v420 = vmul.f32 %v217, %v217
  %v421 = vmul.f32 %v220, %v220
  %v422 = vmul.f32 %v223, %v223
  %v423 = vmul.f32 %v226, %v226
  %v424 = vmul.f32 %v229, %v229
  %v425 = vmul.f32 %v232, %v232
  %v426 = vmul.f32 %v235, %v235
  %v427 = vmul.f32 %v344, %v344
  %v428 = vmul.f32 %v347, %v347
  %v429 = vmul.f32 %v350, %v350
  %v430 = vmul.f32 %v353, %v353
  %v431 = vmul.f32 %v356, %v356
  %v432 = vmul.f32 %v359, %v359
  %v433 = vmul.f32 %v362, %v362
  %v434 = vmul.f32 %v365, %v365
  %v435 = vmul.f32 %v368, %v368
  %v436 = vmul.f32 %v371, %v371
  %v437 = vmul.f32 %v374, %v374
  %v438 = vmul.f32 %v377, %v377
  %v439 = vadd.f32 %v415, %v427
  %v440 = vadd.f32 %v416, %v428
  %v441 = vadd.f32 %v417, %v429
  %v442 = vadd.f32 %v418, %v430
  %v443 = vadd.f32 %v419, %v431
  %v444 = vadd.f32 %v420, %v432
  %v445 = vadd.f32 %v421, %v433
  %v446 = vadd.f32 %v422, %v434
  %v447 = vadd.f32 %v423, %v435
  %v448 = vadd.f32 %v424, %v436
  %v449 = vadd.f32 %v425, %v437
  %v450 = vadd.f32 %v426, %v438
  %v451 = vadd.f32 %v439, 0.0001
  %v452 = vadd.f32 %v440, 0.0001
  %v453 = vadd.f32 %v441, 0.0001
  %v454 = vadd.f32 %v442, 0.0001
  %v455 = vadd.f32 %v443, 0.0001
  %v456 = vadd.f32 %v444, 0.0001
  %v457 = vadd.f32 %v445, 0.0001
  %v458 = vadd.f32 %v446, 0.0001
  %v459 = vadd.f32 %v447, 0.0001
  %v460 = vadd.f32 %v448, 0.0001
  %v461 = vadd.f32 %v449, 0.0001
  %v462 = vadd.f32 %v450, 0.0001
  %v463 = vrcp.pop %v451
  %v464 = vmul.f32 %v451, %v463
  %v465 = vsub.f32 1.0, %v464
  %v466 = vmul.f32 %v463, %v465
  %v467 = vadd.f32 %v463, %v466
  %vm468 = vweird.f32 %v451
  %vm469 = vweird.f32 %v463
  %vm470 = vmor %vm468, %vm469
  %v471 = vsel %vm470, %v463, %v467
  %v472 = vand.u32 2147483647, %v451
  %vm473 = vcmp.eq.f32.partialorder %v472, 8.507059e+37
  %v474 = vand.u32 %v451, 2147483648
  %v475 = vor.u32 1.1754944e-38, %v474
  %v476 = vsel %vm473, %v475, %v471
  %v477 = vrcp.pop %v452
  %v478 = vmul.f32 %v452, %v477
  %v479 = vsub.f32 1.0, %v478
  %v480 = vmul.f32 %v477, %v479
  %v481 = vadd.f32 %v477, %v480
  %vm482 = vweird.f32 %v452
  %vm483 = vweird.f32 %v477
  %vm484 = vmor %vm482, %vm483
  %v485 = vsel %vm484, %v477, %v481
  %v486 = vand.u32 2147483647, %v452
  %vm487 = vcmp.eq.f32.partialorder %v486, 8.507059e+37
  %v488 = vand.u32 %v452, 2147483648
  %v489 = vor.u32 1.1754944e-38, %v488
  %v490 = vsel %vm487, %v489, %v485
  %v491 = vrcp.pop %v453
  %v492 = vmul.f32 %v453, %v491
  %v493 = vsub.f32 1.0, %v492
  %v494 = vmul.f32 %v491, %v493
  %v495 = vadd.f32 %v491, %v494
  %vm496 = vweird.f32 %v453
  %vm497 = vweird.f32 %v491
  %vm498 = vmor %vm496, %vm497
  %v499 = vsel %vm498, %v491, %v495
  %v500 = vand.u32 2147483647, %v453
  %vm501 = vcmp.eq.f32.partialorder %v500, 8.507059e+37
  %v502 = vand.u32 %v453, 2147483648
  %v503 = vor.u32 1.1754944e-38, %v502
  %v504 = vsel %vm501, %v503, %v499
  %v505 = vrcp.pop %v454
  %v506 = vmul.f32 %v454, %v505
  %v507 = vsub.f32 1.0, %v506
  %v508 = vmul.f32 %v505, %v507
  %v509 = vadd.f32 %v505, %v508
  %vm510 = vweird.f32 %v454
  %vm511 = vweird.f32 %v505
  %vm512 = vmor %vm510, %vm511
  %v513 = vsel %vm512, %v505, %v509
  %v514 = vand.u32 2147483647, %v454
  %vm515 = vcmp.eq.f32.partialorder %v514, 8.507059e+37
  %v516 = vand.u32 %v454, 2147483648
  %v517 = vor.u32 1.1754944e-38, %v516
  %v518 = vsel %vm515, %v517, %v513
  %v519 = vrcp.pop %v455
  %v520 = vmul.f32 %v455, %v519
  %v521 = vsub.f32 1.0, %v520
  %v522 = vmul.f32 %v519, %v521
  %v523 = vadd.f32 %v519, %v522
  %vm524 = vweird.f32 %v455
  %vm525 = vweird.f32 %v519
  %vm526 = vmor %vm524, %vm525
  %v527 = vsel %vm526, %v519, %v523
  %v528 = vand.u32 2147483647, %v455
  %vm529 = vcmp.eq.f32.partialorder %v528, 8.507059e+37
  %v530 = vand.u32 %v455, 2147483648
  %v531 = vor.u32 1.1754944e-38, %v530
  %v532 = vsel %vm529, %v531, %v527
  %v533 = vrcp.pop %v456
  %v534 = vmul.f32 %v456, %v533
  %v535 = vsub.f32 1.0, %v534
  %v536 = vmul.f32 %v533, %v535
  %v537 = vadd.f32 %v533, %v536
  %vm538 = vweird.f32 %v456
  %vm539 = vweird.f32 %v533
  %vm540 = vmor %vm538, %vm539
  %v541 = vsel %vm540, %v533, %v537
  %v542 = vand.u32 2147483647, %v456
  %vm543 = vcmp.eq.f32.partialorder %v542, 8.507059e+37
  %v544 = vand.u32 %v456, 2147483648
  %v545 = vor.u32 1.1754944e-38, %v544
  %v546 = vsel %vm543, %v545, %v541
  %v547 = vrcp.pop %v457
  %v548 = vmul.f32 %v457, %v547
  %v549 = vsub.f32 1.0, %v548
  %v550 = vmul.f32 %v547, %v549
  %v551 = vadd.f32 %v547, %v550
  %vm552 = vweird.f32 %v457
  %vm553 = vweird.f32 %v547
  %vm554 = vmor %vm552, %vm553
  %v555 = vsel %vm554, %v547, %v551
  %v556 = vand.u32 2147483647, %v457
  %vm557 = vcmp.eq.f32.partialorder %v556, 8.507059e+37
  %v558 = vand.u32 %v457, 2147483648
  %v559 = vor.u32 1.1754944e-38, %v558
  %v560 = vsel %vm557, %v559, %v555
  %v561 = vrcp.pop %v458
  %v562 = vmul.f32 %v458, %v561
  %v563 = vsub.f32 1.0, %v562
  %v564 = vmul.f32 %v561, %v563
  %v565 = vadd.f32 %v561, %v564
  %vm566 = vweird.f32 %v458
  %vm567 = vweird.f32 %v561
  %vm568 = vmor %vm566, %vm567
  %v569 = vsel %vm568, %v561, %v565
  %v570 = vand.u32 2147483647, %v458
  %vm571 = vcmp.eq.f32.partialorder %v570, 8.507059e+37
  %v572 = vand.u32 %v458, 2147483648
  %v573 = vor.u32 1.1754944e-38, %v572
  %v574 = vsel %vm571, %v573, %v569
  %v575 = vrcp.pop %v459
  %v576 = vmul.f32 %v459, %v575
  %v577 = vsub.f32 1.0, %v576
  %v578 = vmul.f32 %v575, %v577
  %v579 = vadd.f32 %v575, %v578
  %vm580 = vweird.f32 %v459
  %vm581 = vweird.f32 %v575
  %vm582 = vmor %vm580, %vm581
  %v583 = vsel %vm582, %v575, %v579
  %v584 = vand.u32 2147483647, %v459
  %vm585 = vcmp.eq.f32.partialorder %v584, 8.507059e+37
  %v586 = vand.u32 %v459, 2147483648
  %v587 = vor.u32 1.1754944e-38, %v586
  %v588 = vsel %vm585, %v587, %v583
  %v589 = vrcp.pop %v460
  %v590 = vmul.f32 %v460, %v589
  %v591 = vsub.f32 1.0, %v590
  %v592 = vmul.f32 %v589, %v591
  %v593 = vadd.f32 %v589, %v592
  %vm594 = vweird.f32 %v460
  %vm595 = vweird.f32 %v589
  %vm596 = vmor %vm594, %vm595
  %v597 = vsel %vm596, %v589, %v593
  %v598 = vand.u32 2147483647, %v460
  %vm599 = vcmp.eq.f32.partialorder %v598, 8.507059e+37
  %v600 = vand.u32 %v460, 2147483648
  %v601 = vor.u32 1.1754944e-38, %v600
  %v602 = vsel %vm599, %v601, %v597
  %v603 = vrcp.pop %v461
  %v604 = vmul.f32 %v461, %v603
  %v605 = vsub.f32 1.0, %v604
  %v606 = vmul.f32 %v603, %v605
  %v607 = vadd.f32 %v603, %v606
  %vm608 = vweird.f32 %v461
  %vm609 = vweird.f32 %v603
  %vm610 = vmor %vm608, %vm609
  %v611 = vsel %vm610, %v603, %v607
  %v612 = vand.u32 2147483647, %v461
  %vm613 = vcmp.eq.f32.partialorder %v612, 8.507059e+37
  %v614 = vand.u32 %v461, 2147483648
  %v615 = vor.u32 1.1754944e-38, %v614
  %v616 = vsel %vm613, %v615, %v611
  %v617 = vrcp.pop %v462
  %v618 = vmul.f32 %v462, %v617
  %v619 = vsub.f32 1.0, %v618
  %v620 = vmul.f32 %v617, %v619
  %v621 = vadd.f32 %v617, %v620
  %vm622 = vweird.f32 %v462
  %vm623 = vweird.f32 %v617
  %vm624 = vmor %vm622, %vm623
  %v625 = vsel %vm624, %v617, %v621
  %v626 = vand.u32 2147483647, %v462
  %vm627 = vcmp.eq.f32.partialorder %v626, 8.507059e+37
  %v628 = vand.u32 %v462, 2147483648
  %v629 = vor.u32 1.1754944e-38, %v628
  %v630 = vsel %vm627, %v629, %v625
  %v631 = vmul.f32 %v403, %v476
  %v632 = vmul.f32 %v404, %v490
  %v633 = vmul.f32 %v405, %v504
  %v634 = vmul.f32 %v406, %v518
  %v635 = vmul.f32 %v407, %v532
  %v636 = vmul.f32 %v408, %v546
  %v637 = vmul.f32 %v409, %v560
  %v638 = vmul.f32 %v410, %v574
  %v639 = vmul.f32 %v411, %v588
  %v640 = vmul.f32 %v412, %v602
  %v641 = vmul.f32 %v413, %v616
  %v642 = vmul.f32 %v414, %v630
  %643 = vst.msk [vmem:[%s4] sm:$0xff] %vm57, %v631
  %644 = vst.msk [vmem:[%s4 + $0x8] sm:$0xff] %vm57, %v632
  %645 = vst.msk [vmem:[%s4 + $0x10] sm:$0xff] %vm57, %v633
  %646 = vst.msk [vmem:[%s4 + $0x18] sm:$0xff] %vm57, %v634
  %647 = vst.msk [vmem:[%s4 + $0x20] sm:$0xff] %vm57, %v635
  %648 = vst.msk [vmem:[%s4 + $0x28] sm:$0xff] %vm57, %v636
  %649 = vst.msk [vmem:[%s4 + $0x30] sm:$0xff] %vm57, %v637
  %650 = vst.msk [vmem:[%s4 + $0x38] sm:$0xff] %vm57, %v638
  %651 = vst.msk [vmem:[%s4 + $0x40] sm:$0xff] %vm57, %v639
  %652 = vst.msk [vmem:[%s4 + $0x48] sm:$0xff] %vm57, %v640
  %653 = vst.msk [vmem:[%s4 + $0x50] sm:$0xff] %vm57, %v641
  %654 = vst.msk [vmem:[%s4 + $0x58] sm:$0xff] %vm57, %v642
  %v655 = vmul.f32 %v19, %v19
  %v656 = vmul.f32 %v20, %v20
  %v657 = vmul.f32 %v21, %v21
  %v658 = vmul.f32 %v22, %v22
  %v659 = vmul.f32 %v23, %v23
  %v660 = vmul.f32 %v24, %v24
  %v661 = vmul.f32 %v25, %v25
  %v662 = vmul.f32 %v26, %v26
  %v663 = vmul.f32 %v27, %v27
  %v664 = vmul.f32 %v28, %v28
  %v665 = vmul.f32 %v29, %v29
  %v666 = vmul.f32 %v30, %v30
  %v668 = vsel %vm57, %v655, 0
  %v671 = vsel %vm57, %v656, 0
  %v674 = vsel %vm57, %v657, 0
  %v677 = vsel %vm57, %v658, 0
  %v680 = vsel %vm57, %v659, 0
  %v683 = vsel %vm57, %v660, 0
  %v686 = vsel %vm57, %v661, 0
  %v689 = vsel %vm57, %v662, 0
  %v692 = vsel %vm57, %v663, 0
  %v695 = vsel %vm57, %v664, 0
  %v698 = vsel %vm57, %v665, 0
  %v701 = vsel %vm57, %v666, 0
  %703 = vmatpush.msra.mxu0 0.0
  %704 = vmatpush.msra.mxu0 0.0
  %705 = vmatpush.msra.mxu0 0.0
  %706 = vmatpush.msra.mxu0 0.0
  %707 = vmatpush.msra.mxu0 0.0
  %708 = vmatpush.msra.mxu0 0.0
  %709 = vmatpush.msra.mxu0 0.0
  %710 = vmatpush.msra.mxu0 0.0
  %711 = vmatpush.msra.mxu0 0.0
  %712 = vmatpush.msra.mxu0 0.0
  %713 = vmatpush.msra.mxu0 0.0
  %714 = vmatpush.msra.mxu0 0.0
  %715 = vmatpush.msra.mxu0 0.0
  %716 = vmatpush.msra.mxu0 0.0
  %717 = vmatpush.msra.mxu0 %v44
  %718 = vmatpush.msra.mxu0 %v43
  %719 = vmatmul.f32.gmra.mxu0 %v668
  %v720 = vpop.f32.mrf.mxu0
  %v721 = vadd.f32 0.0, %v720
  %722 = vmatmul.f32.gmra.mxu0 %v671
  %v723 = vpop.f32.mrf.mxu0
  %v724 = vadd.f32 0.0, %v723
  %725 = vmatmul.f32.gmra.mxu0 %v674
  %v726 = vpop.f32.mrf.mxu0
  %v727 = vadd.f32 0.0, %v726
  %728 = vmatmul.f32.gmra.mxu0 %v677
  %v729 = vpop.f32.mrf.mxu0
  %v730 = vadd.f32 0.0, %v729
  %731 = vmatmul.f32.gmra.mxu0 %v680
  %v732 = vpop.f32.mrf.mxu0
  %v733 = vadd.f32 0.0, %v732
  %734 = vmatmul.f32.gmra.mxu0 %v683
  %v735 = vpop.f32.mrf.mxu0
  %v736 = vadd.f32 0.0, %v735
  %737 = vmatmul.f32.gmra.mxu0 %v686
  %v738 = vpop.f32.mrf.mxu0
  %v739 = vadd.f32 0.0, %v738
  %740 = vmatmul.f32.gmra.mxu0 %v689
  %v741 = vpop.f32.mrf.mxu0
  %v742 = vadd.f32 0.0, %v741
  %743 = vmatmul.f32.gmra.mxu0 %v692
  %v744 = vpop.f32.mrf.mxu0
  %v745 = vadd.f32 0.0, %v744
  %746 = vmatmul.f32.gmra.mxu0 %v695
  %v747 = vpop.f32.mrf.mxu0
  %v748 = vadd.f32 0.0, %v747
  %749 = vmatmul.f32.gmra.mxu0 %v698
  %v750 = vpop.f32.mrf.mxu0
  %v751 = vadd.f32 0.0, %v750
  %752 = vmatmul.f32.gmra.mxu0 %v701
  %v753 = vpop.f32.mrf.mxu0
  %v754 = vadd.f32 0.0, %v753
  %755 = vdwg.mxu0
  %756 = vmatpush.msra.mxu0 0.0
  %757 = vmatpush.msra.mxu0 0.0
  %758 = vmatpush.msra.mxu0 0.0
  %759 = vmatpush.msra.mxu0 0.0
  %760 = vmatpush.msra.mxu0 %v754
  %761 = vmatpush.msra.mxu0 %v751
  %762 = vmatpush.msra.mxu0 %v748
  %763 = vmatpush.msra.mxu0 %v745
  %764 = vmatpush.msra.mxu0 %v742
  %765 = vmatpush.msra.mxu0 %v739
  %766 = vmatpush.msra.mxu0 %v736
  %767 = vmatpush.msra.mxu0 %v733
  %768 = vmatpush.msra.mxu0 %v730
  %769 = vmatpush.msra.mxu0 %v727
  %770 = vmatpush.msra.mxu0 %v724
  %771 = vmatpush.msra.mxu0 %v721
  %772 = vmatmul.f32.gmra.mxu0 %v149
  %v773 = vpop.f32.mrf.mxu0
  %v774 = vadd.f32 0.0, %v773
  %775 = vmatmul.f32.gmra.mxu0 %v152
  %v776 = vpop.f32.mrf.mxu0
  %v777 = vadd.f32 0.0, %v776
  %778 = vmatmul.f32.gmra.mxu0 %v155
  %v779 = vpop.f32.mrf.mxu0
  %v780 = vadd.f32 0.0, %v779
  %781 = vmatmul.f32.gmra.mxu0 %v158
  %v782 = vpop.f32.mrf.mxu0
  %v783 = vadd.f32 0.0, %v782
  %784 = vmatmul.f32.gmra.mxu0 %v161
  %v785 = vpop.f32.mrf.mxu0
  %v786 = vadd.f32 0.0, %v785
  %787 = vmatmul.f32.gmra.mxu0 %v164
  %v788 = vpop.f32.mrf.mxu0
  %v789 = vadd.f32 0.0, %v788
  %790 = vmatmul.f32.gmra.mxu0 %v167
  %v791 = vpop.f32.mrf.mxu0
  %v792 = vadd.f32 0.0, %v791
  %793 = vmatmul.f32.gmra.mxu0 %v170
  %v794 = vpop.f32.mrf.mxu0
  %v795 = vadd.f32 0.0, %v794
  %796 = vmatmul.f32.gmra.mxu0 %v173
  %v797 = vpop.f32.mrf.mxu0
  %v798 = vadd.f32 0.0, %v797
  %799 = vmatmul.f32.gmra.mxu0 %v176
  %v800 = vpop.f32.mrf.mxu0
  %v801 = vadd.f32 0.0, %v800
  %802 = vmatmul.f32.gmra.mxu0 %v179
  %v803 = vpop.f32.mrf.mxu0
  %v804 = vadd.f32 0.0, %v803
  %805 = vmatmul.f32.gmra.mxu0 %v182
  %v806 = vpop.f32.mrf.mxu0
  %v807 = vadd.f32 0.0, %v806
  %808 = vdwg.mxu0
  %v809 = vmul.f32 %v31, %v31
  %v810 = vmul.f32 %v32, %v32
  %v811 = vmul.f32 %v33, %v33
  %v812 = vmul.f32 %v34, %v34
  %v813 = vmul.f32 %v35, %v35
  %v814 = vmul.f32 %v36, %v36
  %v815 = vmul.f32 %v37, %v37
  %v816 = vmul.f32 %v38, %v38
  %v817 = vmul.f32 %v39, %v39
  %v818 = vmul.f32 %v40, %v40
  %v819 = vmul.f32 %v41, %v41
  %v820 = vmul.f32 %v42, %v42
  %v822 = vsel %vm57, %v809, 0
  %v825 = vsel %vm57, %v810, 0
  %v828 = vsel %vm57, %v811, 0
  %v831 = vsel %vm57, %v812, 0
  %v834 = vsel %vm57, %v813, 0
  %v837 = vsel %vm57, %v814, 0
  %v840 = vsel %vm57, %v815, 0
  %v843 = vsel %vm57, %v816, 0
  %v846 = vsel %vm57, %v817, 0
  %v849 = vsel %vm57, %v818, 0
  %v852 = vsel %vm57, %v819, 0
  %v855 = vsel %vm57, %v820, 0
  %857 = vmatpush.msra.mxu0 0.0
  %858 = vmatpush.msra.mxu0 0.0
  %859 = vmatpush.msra.mxu0 0.0
  %860 = vmatpush.msra.mxu0 0.0
  %861 = vmatpush.msra.mxu0 0.0
  %862 = vmatpush.msra.mxu0 0.0
  %863 = vmatpush.msra.mxu0 0.0
  %864 = vmatpush.msra.mxu0 0.0
  %865 = vmatpush.msra.mxu0 0.0
  %866 = vmatpush.msra.mxu0 0.0
  %867 = vmatpush.msra.mxu0 0.0
  %868 = vmatpush.msra.mxu0 0.0
  %869 = vmatpush.msra.mxu0 0.0
  %870 = vmatpush.msra.mxu0 0.0
  %871 = vmatpush.msra.mxu0 %v44
  %872 = vmatpush.msra.mxu0 %v43
  %873 = vmatmul.f32.gmra.mxu0 %v822
  %v874 = vpop.f32.mrf.mxu0
  %v875 = vadd.f32 0.0, %v874
  %876 = vmatmul.f32.gmra.mxu0 %v825
  %v877 = vpop.f32.mrf.mxu0
  %v878 = vadd.f32 0.0, %v877
  %879 = vmatmul.f32.gmra.mxu0 %v828
  %v880 = vpop.f32.mrf.mxu0
  %v881 = vadd.f32 0.0, %v880
  %882 = vmatmul.f32.gmra.mxu0 %v831
  %v883 = vpop.f32.mrf.mxu0
  %v884 = vadd.f32 0.0, %v883
  %885 = vmatmul.f32.gmra.mxu0 %v834
  %v886 = vpop.f32.mrf.mxu0
  %v887 = vadd.f32 0.0, %v886
  %888 = vmatmul.f32.gmra.mxu0 %v837
  %v889 = vpop.f32.mrf.mxu0
  %v890 = vadd.f32 0.0, %v889
  %891 = vmatmul.f32.gmra.mxu0 %v840
  %v892 = vpop.f32.mrf.mxu0
  %v893 = vadd.f32 0.0, %v892
  %894 = vmatmul.f32.gmra.mxu0 %v843
  %v895 = vpop.f32.mrf.mxu0
  %v896 = vadd.f32 0.0, %v895
  %897 = vmatmul.f32.gmra.mxu0 %v846
  %v898 = vpop.f32.mrf.mxu0
  %v899 = vadd.f32 0.0, %v898
  %900 = vmatmul.f32.gmra.mxu0 %v849
  %v901 = vpop.f32.mrf.mxu0
  %v902 = vadd.f32 0.0, %v901
  %903 = vmatmul.f32.gmra.mxu0 %v852
  %v904 = vpop.f32.mrf.mxu0
  %v905 = vadd.f32 0.0, %v904
  %906 = vmatmul.f32.gmra.mxu0 %v855
  %v907 = vpop.f32.mrf.mxu0
  %v908 = vadd.f32 0.0, %v907
  %909 = vdwg.mxu0
  %910 = vmatpush.msra.mxu0 0.0
  %911 = vmatpush.msra.mxu0 0.0
  %912 = vmatpush.msra.mxu0 0.0
  %913 = vmatpush.msra.mxu0 0.0
  %914 = vmatpush.msra.mxu0 %v908
  %915 = vmatpush.msra.mxu0 %v905
  %916 = vmatpush.msra.mxu0 %v902
  %917 = vmatpush.msra.mxu0 %v899
  %918 = vmatpush.msra.mxu0 %v896
  %919 = vmatpush.msra.mxu0 %v893
  %920 = vmatpush.msra.mxu0 %v890
  %921 = vmatpush.msra.mxu0 %v887
  %922 = vmatpush.msra.mxu0 %v884
  %923 = vmatpush.msra.mxu0 %v881
  %924 = vmatpush.msra.mxu0 %v878
  %925 = vmatpush.msra.mxu0 %v875
  %926 = vmatmul.f32.gmra.mxu0 %v149
  %v927 = vpop.f32.mrf.mxu0
  %v928 = vadd.f32 0.0, %v927
  %929 = vmatmul.f32.gmra.mxu0 %v152
  %v930 = vpop.f32.mrf.mxu0
  %v931 = vadd.f32 0.0, %v930
  %932 = vmatmul.f32.gmra.mxu0 %v155
  %v933 = vpop.f32.mrf.mxu0
  %v934 = vadd.f32 0.0, %v933
  %935 = vmatmul.f32.gmra.mxu0 %v158
  %v936 = vpop.f32.mrf.mxu0
  %v937 = vadd.f32 0.0, %v936
  %938 = vmatmul.f32.gmra.mxu0 %v161
  %v939 = vpop.f32.mrf.mxu0
  %v940 = vadd.f32 0.0, %v939
  %941 = vmatmul.f32.gmra.mxu0 %v164
  %v942 = vpop.f32.mrf.mxu0
  %v943 = vadd.f32 0.0, %v942
  %944 = vmatmul.f32.gmra.mxu0 %v167
  %v945 = vpop.f32.mrf.mxu0
  %v946 = vadd.f32 0.0, %v945
  %947 = vmatmul.f32.gmra.mxu0 %v170
  %v948 = vpop.f32.mrf.mxu0
  %v949 = vadd.f32 0.0, %v948
  %950 = vmatmul.f32.gmra.mxu0 %v173
  %v951 = vpop.f32.mrf.mxu0
  %v952 = vadd.f32 0.0, %v951
  %953 = vmatmul.f32.gmra.mxu0 %v176
  %v954 = vpop.f32.mrf.mxu0
  %v955 = vadd.f32 0.0, %v954
  %956 = vmatmul.f32.gmra.mxu0 %v179
  %v957 = vpop.f32.mrf.mxu0
  %v958 = vadd.f32 0.0, %v957
  %959 = vmatmul.f32.gmra.mxu0 %v182
  %v960 = vpop.f32.mrf.mxu0
  %v961 = vadd.f32 0.0, %v960
  %962 = vdwg.mxu0
  %v963 = vmul.f32 %v19, %v31
  %v964 = vmul.f32 %v20, %v32
  %v965 = vmul.f32 %v21, %v33
  %v966 = vmul.f32 %v22, %v34
  %v967 = vmul.f32 %v23, %v35
  %v968 = vmul.f32 %v24, %v36
  %v969 = vmul.f32 %v25, %v37
  %v970 = vmul.f32 %v26, %v38
  %v971 = vmul.f32 %v27, %v39
  %v972 = vmul.f32 %v28, %v40
  %v973 = vmul.f32 %v29, %v41
  %v974 = vmul.f32 %v30, %v42
  %v976 = vsel %vm57, %v963, 0
  %v979 = vsel %vm57, %v964, 0
  %v982 = vsel %vm57, %v965, 0
  %v985 = vsel %vm57, %v966, 0
  %v988 = vsel %vm57, %v967, 0
  %v991 = vsel %vm57, %v968, 0
  %v994 = vsel %vm57, %v969, 0
  %v997 = vsel %vm57, %v970, 0
  %v1000 = vsel %vm57, %v971, 0
  %v1003 = vsel %vm57, %v972, 0
  %v1006 = vsel %vm57, %v973, 0
  %v1009 = vsel %vm57, %v974, 0
  %1011 = vmatpush.msra.mxu0 0.0
  %1012 = vmatpush.msra.mxu0 0.0
  %1013 = vmatpush.msra.mxu0 0.0
  %1014 = vmatpush.msra.mxu0 0.0
  %1015 = vmatpush.msra.mxu0 0.0
  %1016 = vmatpush.msra.mxu0 0.0
  %1017 = vmatpush.msra.mxu0 0.0
  %1018 = vmatpush.msra.mxu0 0.0
  %1019 = vmatpush.msra.mxu0 0.0
  %1020 = vmatpush.msra.mxu0 0.0
  %1021 = vmatpush.msra.mxu0 0.0
  %1022 = vmatpush.msra.mxu0 0.0
  %1023 = vmatpush.msra.mxu0 0.0
  %1024 = vmatpush.msra.mxu0 0.0
  %1025 = vmatpush.msra.mxu0 %v44
  %1026 = vmatpush.msra.mxu0 %v43
  %1027 = vmatmul.f32.gmra.mxu0 %v976
  %v1028 = vpop.f32.mrf.mxu0
  %v1029 = vadd.f32 0.0, %v1028
  %1030 = vmatmul.f32.gmra.mxu0 %v979
  %v1031 = vpop.f32.mrf.mxu0
  %v1032 = vadd.f32 0.0, %v1031
  %1033 = vmatmul.f32.gmra.mxu0 %v982
  %v1034 = vpop.f32.mrf.mxu0
  %v1035 = vadd.f32 0.0, %v1034
  %1036 = vmatmul.f32.gmra.mxu0 %v985
  %v1037 = vpop.f32.mrf.mxu0
  %v1038 = vadd.f32 0.0, %v1037
  %1039 = vmatmul.f32.gmra.mxu0 %v988
  %v1040 = vpop.f32.mrf.mxu0
  %v1041 = vadd.f32 0.0, %v1040
  %1042 = vmatmul.f32.gmra.mxu0 %v991
  %v1043 = vpop.f32.mrf.mxu0
  %v1044 = vadd.f32 0.0, %v1043
  %1045 = vmatmul.f32.gmra.mxu0 %v994
  %v1046 = vpop.f32.mrf.mxu0
  %v1047 = vadd.f32 0.0, %v1046
  %1048 = vmatmul.f32.gmra.mxu0 %v997
  %v1049 = vpop.f32.mrf.mxu0
  %v1050 = vadd.f32 0.0, %v1049
  %1051 = vmatmul.f32.gmra.mxu0 %v1000
  %v1052 = vpop.f32.mrf.mxu0
  %v1053 = vadd.f32 0.0, %v1052
  %1054 = vmatmul.f32.gmra.mxu0 %v1003
  %v1055 = vpop.f32.mrf.mxu0
  %v1056 = vadd.f32 0.0, %v1055
  %1057 = vmatmul.f32.gmra.mxu0 %v1006
  %v1058 = vpop.f32.mrf.mxu0
  %v1059 = vadd.f32 0.0, %v1058
  %1060 = vmatmul.f32.gmra.mxu0 %v1009
  %v1061 = vpop.f32.mrf.mxu0
  %v1062 = vadd.f32 0.0, %v1061
  %1063 = vdwg.mxu0
  %1064 = vmatpush.msra.mxu0 0.0
  %1065 = vmatpush.msra.mxu0 0.0
  %1066 = vmatpush.msra.mxu0 0.0
  %1067 = vmatpush.msra.mxu0 0.0
  %1068 = vmatpush.msra.mxu0 %v1062
  %1069 = vmatpush.msra.mxu0 %v1059
  %1070 = vmatpush.msra.mxu0 %v1056
  %1071 = vmatpush.msra.mxu0 %v1053
  %1072 = vmatpush.msra.mxu0 %v1050
  %1073 = vmatpush.msra.mxu0 %v1047
  %1074 = vmatpush.msra.mxu0 %v1044
  %1075 = vmatpush.msra.mxu0 %v1041
  %1076 = vmatpush.msra.mxu0 %v1038
  %1077 = vmatpush.msra.mxu0 %v1035
  %1078 = vmatpush.msra.mxu0 %v1032
  %1079 = vmatpush.msra.mxu0 %v1029
  %1080 = vmatmul.f32.gmra.mxu0 %v149
  %v1081 = vpop.f32.mrf.mxu0
  %v1082 = vadd.f32 0.0, %v1081
  %1083 = vmatmul.f32.gmra.mxu0 %v152
  %v1084 = vpop.f32.mrf.mxu0
  %v1085 = vadd.f32 0.0, %v1084
  %1086 = vmatmul.f32.gmra.mxu0 %v155
  %v1087 = vpop.f32.mrf.mxu0
  %v1088 = vadd.f32 0.0, %v1087
  %1089 = vmatmul.f32.gmra.mxu0 %v158
  %v1090 = vpop.f32.mrf.mxu0
  %v1091 = vadd.f32 0.0, %v1090
  %1092 = vmatmul.f32.gmra.mxu0 %v161
  %v1093 = vpop.f32.mrf.mxu0
  %v1094 = vadd.f32 0.0, %v1093
  %1095 = vmatmul.f32.gmra.mxu0 %v164
  %v1096 = vpop.f32.mrf.mxu0
  %v1097 = vadd.f32 0.0, %v1096
  %1098 = vmatmul.f32.gmra.mxu0 %v167
  %v1099 = vpop.f32.mrf.mxu0
  %v1100 = vadd.f32 0.0, %v1099
  %1101 = vmatmul.f32.gmra.mxu0 %v170
  %v1102 = vpop.f32.mrf.mxu0
  %v1103 = vadd.f32 0.0, %v1102
  %1104 = vmatmul.f32.gmra.mxu0 %v173
  %v1105 = vpop.f32.mrf.mxu0
  %v1106 = vadd.f32 0.0, %v1105
  %1107 = vmatmul.f32.gmra.mxu0 %v176
  %v1108 = vpop.f32.mrf.mxu0
  %v1109 = vadd.f32 0.0, %v1108
  %1110 = vmatmul.f32.gmra.mxu0 %v179
  %v1111 = vpop.f32.mrf.mxu0
  %v1112 = vadd.f32 0.0, %v1111
  %1113 = vmatmul.f32.gmra.mxu0 %v182
  %v1114 = vpop.f32.mrf.mxu0
  %v1115 = vadd.f32 0.0, %v1114
  %1116 = vdwg.mxu0
  %v1117 = vsub.f32 %v774, %v415
  %v1118 = vsub.f32 %v777, %v416
  %v1119 = vsub.f32 %v780, %v417
  %v1120 = vsub.f32 %v783, %v418
  %v1121 = vsub.f32 %v786, %v419
  %v1122 = vsub.f32 %v789, %v420
  %v1123 = vsub.f32 %v792, %v421
  %v1124 = vsub.f32 %v795, %v422
  %v1125 = vsub.f32 %v798, %v423
  %v1126 = vsub.f32 %v801, %v424
  %v1127 = vsub.f32 %v804, %v425
  %v1128 = vsub.f32 %v807, %v426
  %v1129 = vsub.f32 %v928, %v427
  %v1130 = vsub.f32 %v931, %v428
  %v1131 = vsub.f32 %v934, %v429
  %v1132 = vsub.f32 %v937, %v430
  %v1133 = vsub.f32 %v940, %v431
  %v1134 = vsub.f32 %v943, %v432
  %v1135 = vsub.f32 %v946, %v433
  %v1136 = vsub.f32 %v949, %v434
  %v1137 = vsub.f32 %v952, %v435
  %v1138 = vsub.f32 %v955, %v436
  %v1139 = vsub.f32 %v958, %v437
  %v1140 = vsub.f32 %v961, %v438
  %v1141 = vmul.f32 %v202, %v344
  %v1142 = vmul.f32 %v205, %v347
  %v1143 = vmul.f32 %v208, %v350
  %v1144 = vmul.f32 %v211, %v353
  %v1145 = vmul.f32 %v214, %v356
  %v1146 = vmul.f32 %v217, %v359
  %v1147 = vmul.f32 %v220, %v362
  %v1148 = vmul.f32 %v223, %v365
  %v1149 = vmul.f32 %v226, %v368
  %v1150 = vmul.f32 %v229, %v371
  %v1151 = vmul.f32 %v232, %v374
  %v1152 = vmul.f32 %v235, %v377
  %v1153 = vsub.f32 %v1082, %v1141
  %v1154 = vsub.f32 %v1085, %v1142
  %v1155 = vsub.f32 %v1088, %v1143
  %v1156 = vsub.f32 %v1091, %v1144
  %v1157 = vsub.f32 %v1094, %v1145
  %v1158 = vsub.f32 %v1097, %v1146
  %v1159 = vsub.f32 %v1100, %v1147
  %v1160 = vsub.f32 %v1103, %v1148
  %v1161 = vsub.f32 %v1106, %v1149
  %v1162 = vsub.f32 %v1109, %v1150
  %v1163 = vsub.f32 %v1112, %v1151
  %v1164 = vsub.f32 %v1115, %v1152
  %v1165 = vmul.f32 %v1153, 2.0
  %v1166 = vmul.f32 %v1154, 2.0
  %v1167 = vmul.f32 %v1155, 2.0
  %v1168 = vmul.f32 %v1156, 2.0
  %v1169 = vmul.f32 %v1157, 2.0
  %v1170 = vmul.f32 %v1158, 2.0
  %v1171 = vmul.f32 %v1159, 2.0
  %v1172 = vmul.f32 %v1160, 2.0
  %v1173 = vmul.f32 %v1161, 2.0
  %v1174 = vmul.f32 %v1162, 2.0
  %v1175 = vmul.f32 %v1163, 2.0
  %v1176 = vmul.f32 %v1164, 2.0
  %v1177 = vadd.f32 %v1165, 0.0009
  %v1178 = vadd.f32 %v1166, 0.0009
  %v1179 = vadd.f32 %v1167, 0.0009
  %v1180 = vadd.f32 %v1168, 0.0009
  %v1181 = vadd.f32 %v1169, 0.0009
  %v1182 = vadd.f32 %v1170, 0.0009
  %v1183 = vadd.f32 %v1171, 0.0009
  %v1184 = vadd.f32 %v1172, 0.0009
  %v1185 = vadd.f32 %v1173, 0.0009
  %v1186 = vadd.f32 %v1174, 0.0009
  %v1187 = vadd.f32 %v1175, 0.0009
  %v1188 = vadd.f32 %v1176, 0.0009
  %v1189 = vadd.f32 %v1117, %v1129
  %v1190 = vadd.f32 %v1118, %v1130
  %v1191 = vadd.f32 %v1119, %v1131
  %v1192 = vadd.f32 %v1120, %v1132
  %v1193 = vadd.f32 %v1121, %v1133
  %v1194 = vadd.f32 %v1122, %v1134
  %v1195 = vadd.f32 %v1123, %v1135
  %v1196 = vadd.f32 %v1124, %v1136
  %v1197 = vadd.f32 %v1125, %v1137
  %v1198 = vadd.f32 %v1126, %v1138
  %v1199 = vadd.f32 %v1127, %v1139
  %v1200 = vadd.f32 %v1128, %v1140
  %v1201 = vadd.f32 %v1189, 0.0009
  %v1202 = vadd.f32 %v1190, 0.0009
  %v1203 = vadd.f32 %v1191, 0.0009
  %v1204 = vadd.f32 %v1192, 0.0009
  %v1205 = vadd.f32 %v1193, 0.0009
  %v1206 = vadd.f32 %v1194, 0.0009
  %v1207 = vadd.f32 %v1195, 0.0009
  %v1208 = vadd.f32 %v1196, 0.0009
  %v1209 = vadd.f32 %v1197, 0.0009
  %v1210 = vadd.f32 %v1198, 0.0009
  %v1211 = vadd.f32 %v1199, 0.0009
  %v1212 = vadd.f32 %v1200, 0.0009
  %v1213 = vrcp.pop %v1201
  %v1214 = vmul.f32 %v1201, %v1213
  %v1215 = vsub.f32 1.0, %v1214
  %v1216 = vmul.f32 %v1213, %v1215
  %v1217 = vadd.f32 %v1213, %v1216
  %vm1218 = vweird.f32 %v1201
  %vm1219 = vweird.f32 %v1213
  %vm1220 = vmor %vm1218, %vm1219
  %v1221 = vsel %vm1220, %v1213, %v1217
  %v1222 = vand.u32 2147483647, %v1201
  %vm1223 = vcmp.eq.f32.partialorder %v1222, 8.507059e+37
  %v1224 = vand.u32 %v1201, 2147483648
  %v1225 = vor.u32 1.1754944e-38, %v1224
  %v1226 = vsel %vm1223, %v1225, %v1221
  %v1227 = vrcp.pop %v1202
  %v1228 = vmul.f32 %v1202, %v1227
  %v1229 = vsub.f32 1.0, %v1228
  %v1230 = vmul.f32 %v1227, %v1229
  %v1231 = vadd.f32 %v1227, %v1230
  %vm1232 = vweird.f32 %v1202
  %vm1233 = vweird.f32 %v1227
  %vm1234 = vmor %vm1232, %vm1233
  %v1235 = vsel %vm1234, %v1227, %v1231
  %v1236 = vand.u32 2147483647, %v1202
  %vm1237 = vcmp.eq.f32.partialorder %v1236, 8.507059e+37
  %v1238 = vand.u32 %v1202, 2147483648
  %v1239 = vor.u32 1.1754944e-38, %v1238
  %v1240 = vsel %vm1237, %v1239, %v1235
  %v1241 = vrcp.pop %v1203
  %v1242 = vmul.f32 %v1203, %v1241
  %v1243 = vsub.f32 1.0, %v1242
  %v1244 = vmul.f32 %v1241, %v1243
  %v1245 = vadd.f32 %v1241, %v1244
  %vm1246 = vweird.f32 %v1203
  %vm1247 = vweird.f32 %v1241
  %vm1248 = vmor %vm1246, %vm1247
  %v1249 = vsel %vm1248, %v1241, %v1245
  %v1250 = vand.u32 2147483647, %v1203
  %vm1251 = vcmp.eq.f32.partialorder %v1250, 8.507059e+37
  %v1252 = vand.u32 %v1203, 2147483648
  %v1253 = vor.u32 1.1754944e-38, %v1252
  %v1254 = vsel %vm1251, %v1253, %v1249
  %v1255 = vrcp.pop %v1204
  %v1256 = vmul.f32 %v1204, %v1255
  %v1257 = vsub.f32 1.0, %v1256
  %v1258 = vmul.f32 %v1255, %v1257
  %v1259 = vadd.f32 %v1255, %v1258
  %vm1260 = vweird.f32 %v1204
  %vm1261 = vweird.f32 %v1255
  %vm1262 = vmor %vm1260, %vm1261
  %v1263 = vsel %vm1262, %v1255, %v1259
  %v1264 = vand.u32 2147483647, %v1204
  %vm1265 = vcmp.eq.f32.partialorder %v1264, 8.507059e+37
  %v1266 = vand.u32 %v1204, 2147483648
  %v1267 = vor.u32 1.1754944e-38, %v1266
  %v1268 = vsel %vm1265, %v1267, %v1263
  %v1269 = vrcp.pop %v1205
  %v1270 = vmul.f32 %v1205, %v1269
  %v1271 = vsub.f32 1.0, %v1270
  %v1272 = vmul.f32 %v1269, %v1271
  %v1273 = vadd.f32 %v1269, %v1272
  %vm1274 = vweird.f32 %v1205
  %vm1275 = vweird.f32 %v1269
  %vm1276 = vmor %vm1274, %vm1275
  %v1277 = vsel %vm1276, %v1269, %v1273
  %v1278 = vand.u32 2147483647, %v1205
  %vm1279 = vcmp.eq.f32.partialorder %v1278, 8.507059e+37
  %v1280 = vand.u32 %v1205, 2147483648
  %v1281 = vor.u32 1.1754944e-38, %v1280
  %v1282 = vsel %vm1279, %v1281, %v1277
  %v1283 = vrcp.pop %v1206
  %v1284 = vmul.f32 %v1206, %v1283
  %v1285 = vsub.f32 1.0, %v1284
  %v1286 = vmul.f32 %v1283, %v1285
  %v1287 = vadd.f32 %v1283, %v1286
  %vm1288 = vweird.f32 %v1206
  %vm1289 = vweird.f32 %v1283
  %vm1290 = vmor %vm1288, %vm1289
  %v1291 = vsel %vm1290, %v1283, %v1287
  %v1292 = vand.u32 2147483647, %v1206
  %vm1293 = vcmp.eq.f32.partialorder %v1292, 8.507059e+37
  %v1294 = vand.u32 %v1206, 2147483648
  %v1295 = vor.u32 1.1754944e-38, %v1294
  %v1296 = vsel %vm1293, %v1295, %v1291
  %v1297 = vrcp.pop %v1207
  %v1298 = vmul.f32 %v1207, %v1297
  %v1299 = vsub.f32 1.0, %v1298
  %v1300 = vmul.f32 %v1297, %v1299
  %v1301 = vadd.f32 %v1297, %v1300
  %vm1302 = vweird.f32 %v1207
  %vm1303 = vweird.f32 %v1297
  %vm1304 = vmor %vm1302, %vm1303
  %v1305 = vsel %vm1304, %v1297, %v1301
  %v1306 = vand.u32 2147483647, %v1207
  %vm1307 = vcmp.eq.f32.partialorder %v1306, 8.507059e+37
  %v1308 = vand.u32 %v1207, 2147483648
  %v1309 = vor.u32 1.1754944e-38, %v1308
  %v1310 = vsel %vm1307, %v1309, %v1305
  %v1311 = vrcp.pop %v1208
  %v1312 = vmul.f32 %v1208, %v1311
  %v1313 = vsub.f32 1.0, %v1312
  %v1314 = vmul.f32 %v1311, %v1313
  %v1315 = vadd.f32 %v1311, %v1314
  %vm1316 = vweird.f32 %v1208
  %vm1317 = vweird.f32 %v1311
  %vm1318 = vmor %vm1316, %vm1317
  %v1319 = vsel %vm1318, %v1311, %v1315
  %v1320 = vand.u32 2147483647, %v1208
  %vm1321 = vcmp.eq.f32.partialorder %v1320, 8.507059e+37
  %v1322 = vand.u32 %v1208, 2147483648
  %v1323 = vor.u32 1.1754944e-38, %v1322
  %v1324 = vsel %vm1321, %v1323, %v1319
  %v1325 = vrcp.pop %v1209
  %v1326 = vmul.f32 %v1209, %v1325
  %v1327 = vsub.f32 1.0, %v1326
  %v1328 = vmul.f32 %v1325, %v1327
  %v1329 = vadd.f32 %v1325, %v1328
  %vm1330 = vweird.f32 %v1209
  %vm1331 = vweird.f32 %v1325
  %vm1332 = vmor %vm1330, %vm1331
  %v1333 = vsel %vm1332, %v1325, %v1329
  %v1334 = vand.u32 2147483647, %v1209
  %vm1335 = vcmp.eq.f32.partialorder %v1334, 8.507059e+37
  %v1336 = vand.u32 %v1209, 2147483648
  %v1337 = vor.u32 1.1754944e-38, %v1336
  %v1338 = vsel %vm1335, %v1337, %v1333
  %v1339 = vrcp.pop %v1210
  %v1340 = vmul.f32 %v1210, %v1339
  %v1341 = vsub.f32 1.0, %v1340
  %v1342 = vmul.f32 %v1339, %v1341
  %v1343 = vadd.f32 %v1339, %v1342
  %vm1344 = vweird.f32 %v1210
  %vm1345 = vweird.f32 %v1339
  %vm1346 = vmor %vm1344, %vm1345
  %v1347 = vsel %vm1346, %v1339, %v1343
  %v1348 = vand.u32 2147483647, %v1210
  %vm1349 = vcmp.eq.f32.partialorder %v1348, 8.507059e+37
  %v1350 = vand.u32 %v1210, 2147483648
  %v1351 = vor.u32 1.1754944e-38, %v1350
  %v1352 = vsel %vm1349, %v1351, %v1347
  %v1353 = vrcp.pop %v1211
  %v1354 = vmul.f32 %v1211, %v1353
  %v1355 = vsub.f32 1.0, %v1354
  %v1356 = vmul.f32 %v1353, %v1355
  %v1357 = vadd.f32 %v1353, %v1356
  %vm1358 = vweird.f32 %v1211
  %vm1359 = vweird.f32 %v1353
  %vm1360 = vmor %vm1358, %vm1359
  %v1361 = vsel %vm1360, %v1353, %v1357
  %v1362 = vand.u32 2147483647, %v1211
  %vm1363 = vcmp.eq.f32.partialorder %v1362, 8.507059e+37
  %v1364 = vand.u32 %v1211, 2147483648
  %v1365 = vor.u32 1.1754944e-38, %v1364
  %v1366 = vsel %vm1363, %v1365, %v1361
  %v1367 = vrcp.pop %v1212
  %v1368 = vmul.f32 %v1212, %v1367
  %v1369 = vsub.f32 1.0, %v1368
  %v1370 = vmul.f32 %v1367, %v1369
  %v1371 = vadd.f32 %v1367, %v1370
  %vm1372 = vweird.f32 %v1212
  %vm1373 = vweird.f32 %v1367
  %vm1374 = vmor %vm1372, %vm1373
  %v1375 = vsel %vm1374, %v1367, %v1371
  %v1376 = vand.u32 2147483647, %v1212
  %vm1377 = vcmp.eq.f32.partialorder %v1376, 8.507059e+37
  %v1378 = vand.u32 %v1212, 2147483648
  %v1379 = vor.u32 1.1754944e-38, %v1378
  %v1380 = vsel %vm1377, %v1379, %v1375
  %v1381 = vmul.f32 %v1177, %v1226
  %v1382 = vmul.f32 %v1178, %v1240
  %v1383 = vmul.f32 %v1179, %v1254
  %v1384 = vmul.f32 %v1180, %v1268
  %v1385 = vmul.f32 %v1181, %v1282
  %v1386 = vmul.f32 %v1182, %v1296
  %v1387 = vmul.f32 %v1183, %v1310
  %v1388 = vmul.f32 %v1184, %v1324
  %v1389 = vmul.f32 %v1185, %v1338
  %v1390 = vmul.f32 %v1186, %v1352
  %v1391 = vmul.f32 %v1187, %v1366
  %v1392 = vmul.f32 %v1188, %v1380
  %1393 = vst.msk [vmem:[%s5] sm:$0xff] %vm57, %v1381
  %1394 = vst.msk [vmem:[%s5 + $0x8] sm:$0xff] %vm57, %v1382
  %1395 = vst.msk [vmem:[%s5 + $0x10] sm:$0xff] %vm57, %v1383
  %1396 = vst.msk [vmem:[%s5 + $0x18] sm:$0xff] %vm57, %v1384
  %1397 = vst.msk [vmem:[%s5 + $0x20] sm:$0xff] %vm57, %v1385
  %1398 = vst.msk [vmem:[%s5 + $0x28] sm:$0xff] %vm57, %v1386
  %1399 = vst.msk [vmem:[%s5 + $0x30] sm:$0xff] %vm57, %v1387
  %1400 = vst.msk [vmem:[%s5 + $0x38] sm:$0xff] %vm57, %v1388
  %1401 = vst.msk [vmem:[%s5 + $0x40] sm:$0xff] %vm57, %v1389
  %1402 = vst.msk [vmem:[%s5 + $0x48] sm:$0xff] %vm57, %v1390
  %1403 = vst.msk [vmem:[%s5 + $0x50] sm:$0xff] %vm57, %v1391
  %1404 = vst.msk [vmem:[%s5 + $0x58] sm:$0xff] %vm57, %v1392
  // Predicated region
  $region18: #{tpu_custom_call.1} parent=0 // pred_check
    _
  $region19: #{tpu_custom_call.1} parent=0 // pred_check_branch
    %1406 = sbr.rel (0) target = $region21
  $region20: #{tpu_custom_call.1} parent=0 // pred_region
    _
  $region21: #{tpu_custom_call.1} parent=0 // pred_fallthru
    _
  // Predicated region
  $region22: #{tpu_custom_call.1} parent=0 // pred_check
    _
  $region23: #{tpu_custom_call.1} parent=0 // pred_check_branch
    %1408 = sbr.rel (0) target = $region25
  $region24: #{tpu_custom_call.1} parent=0 // pred_region
    _
  $region25: #{tpu_custom_call.1} parent=0 // pred_fallthru
    _
  // Predicated region
  $region26: #{tpu_custom_call.1} parent=0 // pred_check
    _
  $region27: #{tpu_custom_call.1} parent=0 // pred_check_branch
    %1410 = sbr.rel (0) target = $region29
  $region28: #{tpu_custom_call.1} parent=0 // pred_region
    _
  $region29: #{tpu_custom_call.1} parent=0 // pred_fallthru
    _
  // Predicated region
  $region30: #{tpu_custom_call.1} parent=0 // pred_check
    _
  $region31: #{tpu_custom_call.1} parent=0 // pred_check_branch
    %1412 = sbr.rel (0) target = $region33
  $region32: #{tpu_custom_call.1} parent=0 // pred_region
    _
  $region33: #{tpu_custom_call.1} parent=0 // pred_fallthru
    _

</llo_original>
